<compile_context>
chip_gen: v7x
topology: tpu7x:2x2x1
jax: 0.10.0
libtpu: 0.0.40
codegen_flags: <defaults>
</compile_context>

<pallas_src>
import functools

import numpy as np
import jax
import jax.numpy as jnp
from jax import lax
from jax.experimental import pallas as pl
from jax.experimental.pallas import tpu as pltpu


# ----------------------------------------------------------------------------
# Concrete _OuterNetworkModule instantiation (graph metadata + parameters).
# ----------------------------------------------------------------------------
F_IN = 32      # input feature size
F_HID = 32     # fc1 / fc2 / output feature size
LANE = 128     # TPU lane width used for the internal hidden activations

ORDER = ("fc1", "fc2", "output")
INPUTS = {
    "fc1": ("input",),
    "fc2": ("fc1", "ph_fc1"),
    "output": ("fc2", "fc1"),
}
PLACEHOLDERS_REV = {"fc1": "ph_fc1"}
CYCLE_OUTPUTS = {}
INPUT_MODES = {"fc2": "stack", "output": "sum"}
LAYER_RELU = {"fc1": True, "fc2": True, "output": False}
LAYER_IN_FEATURES = {"fc1": F_IN, "fc2": F_HID + F_HID, "output": F_HID}
LAYER_OUT_FEATURES = {"fc1": F_HID, "fc2": F_HID, "output": F_HID}


def init_params(key):
    params = {}
    for name in ORDER:
        kw, kb, key = jax.random.split(key, 3)
        k_in = LAYER_IN_FEATURES[name]
        k_out = LAYER_OUT_FEATURES[name]
        scale = 1.0 / jnp.sqrt(jnp.float32(k_in))
        params[name] = {
            "w": jax.random.uniform(kw, (k_in, k_out), jnp.float32, -scale, scale),
            "b": jax.random.uniform(kb, (k_out,), jnp.float32, -scale, scale),
        }
    return params


def prepare_padded_params(params):
    """One-time prep: bf16 MXU weights (lane/K padded where needed), f32 biases.

    W2 is kept un-split: the 'stack' merge is handled in-kernel by lane-packing
    ph into lanes [F_HID, 2*F_HID) so a single matmul consumes [fc1 | ph]."""
    w1, b1 = params["fc1"]["w"], params["fc1"]["b"]
    w2, b2 = params["fc2"]["w"], params["fc2"]["b"]
    w3, b3 = params["output"]["w"], params["output"]["b"]
    w1p = jnp.zeros((F_IN, LANE), jnp.float32).at[:, :F_HID].set(w1)
    w2p = jnp.zeros((LANE, LANE), jnp.float32).at[:2 * F_HID, :F_HID].set(w2)
    w3p = jnp.zeros((LANE, F_HID), jnp.float32).at[:F_HID, :].set(w3)
    return {
        "w1": w1p.astype(jnp.bfloat16),
        "w2": w2p.astype(jnp.bfloat16),
        "w3": w3p.astype(jnp.bfloat16),
        "b1": jnp.zeros((1, LANE), jnp.float32).at[0, :F_HID].set(b1),
        "b2": jnp.zeros((1, LANE), jnp.float32).at[0, :F_HID].set(b2),
        "b3": b3.reshape(1, F_HID).astype(jnp.float32),
    }


def get_initial_state(batch_size):
    # All leaf layers are stateless -> empty tuples; recurrent placeholder zeros.
    state = {name: () for name in ORDER}
    recurrent_outputs = {
        PLACEHOLDERS_REV[layer]: jnp.zeros(
            (batch_size, LAYER_OUT_FEATURES[layer]), jnp.float32)
        for layer in PLACEHOLDERS_REV
    }
    return (state, recurrent_outputs)


# ----------------------------------------------------------------------------
# Fused Pallas kernel: whole graph (fc1 -> shift -> fc2 -> output) per time-tile.
# ----------------------------------------------------------------------------
def _fused_outer_net_kernel(prev_ref, x_ref, w1_ref, w2_ref, w3_ref,
                            b1_ref, b2_ref, b3_ref,
                            out_ref, last_ref,
                            carry_sc, ph_sc, *, tile_rows, batch):
    f32 = jnp.float32
    bf16 = jnp.bfloat16

    # On the first time-tile, seed the cross-tile carry with the previous-call
    # recurrent output ph_fc1 (already placed in rows [0, batch), lanes [0, 32)).
    @pl.when(pl.program_id(0) == 0)
    def _():
        carry_sc[...] = prev_ref[...]

    # fc1 = ReLU(x @ W1 + b1): (rows, F_IN) x (F_IN, 128) with bf16 MXU operands
    # and f32 accumulation; lanes [F_HID, 128) stay exactly zero.
    fc1 = jnp.maximum(
        jnp.dot(x_ref[...].astype(bf16), w1_ref[...], preferred_element_type=f32)
        + b1_ref[...],
        0.0)

    # Recurrent placeholder ph[r] = fc1[r - batch] on the flattened (t, b) row
    # axis: a sublane roll (XLU, off the MXU critical path) into a VMEM scratch.
    # The wrapped rows [0, batch) of the roll conveniently hold fc1's last time
    # step -> reuse them as the next carry before overwriting with this tile's
    # incoming carry.
    ph_sc[...] = pltpu.roll(fc1, batch, 0)
    tail = ph_sc[pl.ds(0, batch), :]                      # fc1[last time step]
    ph_sc[pl.ds(0, batch), :] = carry_sc[pl.ds(0, batch), :]

    # 'stack' merge fused into ONE matmul: ph is lane-rolled into lanes
    # [F_HID, 2*F_HID) (fc1 occupies lanes [0, F_HID), everything else is zero),
    # then multiplied by the un-split padded W2.
    act2 = fc1 + pltpu.roll(ph_sc[...], F_HID, 1)
    fc2 = jnp.maximum(
        jnp.dot(act2.astype(bf16), w2_ref[...], preferred_element_type=f32)
        + b2_ref[...],
        0.0)

    # 'sum' merge folded into the output matmul: out = (fc1 + fc2) @ W3 + b3.
    out = (jnp.dot((fc1 + fc2).astype(bf16), w3_ref[...],
                   preferred_element_type=f32)
           + b3_ref[...])
    out_ref[...] = out.astype(out_ref.dtype)

    # Carry fc1's last time step to the next tile and expose it to the caller
    # (only the final grid step's value survives in last_ref).
    carry_sc[pl.ds(0, batch), :] = tail
    last_ref[...] = tail[:, :F_HID].astype(last_ref.dtype)


def _choose_tile_t(T, B, target_rows=2048):
    """Largest divisor of T whose row count (d*B) is 8-aligned and <= target."""
    best = None
    for d in range(1, T + 1):
        if T % d == 0 and d * B <= target_rows and (d * B) % 8 == 0:
            best = d
    return best if best is not None else T


@functools.partial(jax.jit, static_argnames=("tile_t",))
def _fused_forward(padded_params, inp, prev_rec, *, tile_t=None):
    """inp: (T, B, F_IN) f32, prev_rec: (B, F_HID) f32.
    Returns (output (T, B, F_HID), fc1_last (B, F_HID))."""
    T, B, _ = inp.shape
    if tile_t is None:
        tile_t = _choose_tile_t(T, B)
    assert T % tile_t == 0, (T, tile_t)
    tile_rows = tile_t * B
    num_tiles = T // tile_t
    R = T * B
    assert tile_rows >= B
    carry_rows = max(8, ((B + 7) // 8) * 8)

    # Raw (row, feature) input view; tiny lane-dense carry block (no R-row pads).
    x_flat = inp.reshape(R, F_IN)
    prev_pad = jnp.zeros((carry_rows, LANE), jnp.float32).at[:B, :F_HID].set(prev_rec)

    flops = 2 * R * F_IN * LANE + 2 * R * LANE * LANE + 2 * R * LANE * F_HID
    bytes_accessed = (4 * R * F_IN                      # input
                      + 4 * carry_rows * LANE           # prev carry
                      + 2 * (F_IN * LANE + LANE * LANE + LANE * F_HID)  # bf16 W
                      + 4 * (2 * LANE + F_HID)          # biases
                      + 4 * R * F_HID                   # output
                      + 4 * B * F_HID)                  # last-step carry out

    kernel = functools.partial(_fused_outer_net_kernel,
                               tile_rows=tile_rows, batch=B)

    grid_spec = pltpu.PrefetchScalarGridSpec(
        num_scalar_prefetch=0,
        grid=(num_tiles,),
        in_specs=[
            pl.BlockSpec((carry_rows, LANE), lambda g: (0, 0)),   # prev carry
            pl.BlockSpec((tile_rows, F_IN), lambda g: (g, 0)),    # x (time tile)
            pl.BlockSpec((F_IN, LANE), lambda g: (0, 0)),         # W1 (bf16)
            pl.BlockSpec((LANE, LANE), lambda g: (0, 0)),         # W2 (bf16)
            pl.BlockSpec((LANE, F_HID), lambda g: (0, 0)),        # W3 (bf16)
            pl.BlockSpec((1, LANE), lambda g: (0, 0)),            # b1
            pl.BlockSpec((1, LANE), lambda g: (0, 0)),            # b2
            pl.BlockSpec((1, F_HID), lambda g: (0, 0)),           # b3
        ],
        out_specs=(
            pl.BlockSpec((tile_rows, F_HID), lambda g: (g, 0)),   # output tile
            pl.BlockSpec((B, F_HID), lambda g: (0, 0)),           # fc1 last step
        ),
        scratch_shapes=[
            pltpu.VMEM((carry_rows, LANE), jnp.float32),          # cross-tile carry
            pltpu.VMEM((tile_rows, LANE), jnp.float32),           # ph staging
        ],
    )

    out_flat, fc1_last = pl.pallas_call(
        kernel,
        out_shape=(jax.ShapeDtypeStruct((R, F_HID), jnp.float32),
                   jax.ShapeDtypeStruct((B, F_HID), jnp.float32)),
        grid_spec=grid_spec,
        compiler_params=pltpu.CompilerParams(
            dimension_semantics=("arbitrary",),      # carry flows along time tiles
            vmem_limit_bytes=32 * 1024 * 1024),
        cost_estimate=pl.CostEstimate(
            flops=flops, transcendentals=0, bytes_accessed=bytes_accessed),
    )(prev_pad, x_flat,
      padded_params["w1"], padded_params["w2"], padded_params["w3"],
      padded_params["b1"], padded_params["b2"], padded_params["b3"])

    return out_flat.reshape(T, B, F_HID), fc1_last


# ----------------------------------------------------------------------------
# _OuterNetworkModule.forward equivalent (thin wrapper over the fused kernel).
# ----------------------------------------------------------------------------
def outer_network_forward(padded_params, inp, hidden_state, *, tile_t=None):
    """inp: (T, B, F_IN). Returns (output (T,B,F_HID), (new_state, new_recurrent_outputs))."""
    state, recurrent_outputs = hidden_state
    output, fc1_last = _fused_forward(padded_params, inp,
                                      recurrent_outputs["ph_fc1"], tile_t=tile_t)
    new_state = {name: state[name] for name in ORDER}   # stateless leaves pass () through
    new_recurrent_outputs = {"ph_fc1": fc1_last}        # _full_state=False -> last step only
    return output, (new_state, new_recurrent_outputs)


# ----------------------------------------------------------------------------
# Pure-JAX reference mirroring the original (unfused) PyTorch control flow.
# ----------------------------------------------------------------------------
def reference_forward(params, inp, hidden_state):
    state, recurrent_outputs = hidden_state
    new_state, new_rec = {}, {}
    results = {"input": inp}
    for name in ORDER:
        parents = INPUTS[name]
        if len(parents) > 1:
            merged = [results[p].reshape(results[p].shape[:2] + (-1,)) for p in parents]
            if INPUT_MODES[name] == "stack":
                x = jnp.concatenate(merged, axis=-1)
            else:  # 'sum'
                x = sum(merged[1:], merged[0])
        else:
            x = results[parents[0]]
        y = jnp.einsum("tbk,kn->tbn", x, params[name]["w"],
                       precision=lax.Precision.HIGHEST) + params[name]["b"]
        if LAYER_RELU[name]:
            y = jnp.maximum(y, 0.0)
        results[name] = y
        new_state[name] = state[name]
        if name in PLACEHOLDERS_REV:
            ph = PLACEHOLDERS_REV[name]
            new_rec[ph] = y[-1]
            results[ph] = jnp.concatenate((recurrent_outputs[ph][None], y[:-1]), axis=0)
    return results["output"], (new_state, new_rec)


# ----------------------------------------------------------------------------
if __name__ == "__main__":
    key = jax.random.PRNGKey(0)
    k_params, k_inp = jax.random.split(key)

    T, B = 8, 2
    params = init_params(k_params)
    padded_params = prepare_padded_params(params)
    inp = jax.random.normal(k_inp, (T, B, F_IN), jnp.float32)

    hidden_state = get_initial_state(B)
    # tile_t=4 -> two time-tiles of 8 rows each: exercises the cross-tile carry.
    out, (new_state, new_rec) = outer_network_forward(
        padded_params, inp, hidden_state, tile_t=4)

    out = jax.block_until_ready(out)
    jax.block_until_ready(new_rec["ph_fc1"])

    assert out.shape == (T, B, F_HID), out.shape
    assert new_rec["ph_fc1"].shape == (B, F_HID), new_rec["ph_fc1"].shape

    ref_out, (_, ref_rec) = reference_forward(params, inp, hidden_state)
    # bf16 MXU operands (f32 accumulate) vs f32 HIGHEST-precision reference.
    np.testing.assert_allclose(np.asarray(out), np.asarray(ref_out),
                               rtol=5e-2, atol=5e-2)
    np.testing.assert_allclose(np.asarray(new_rec["ph_fc1"]),
                               np.asarray(ref_rec["ph_fc1"]),
                               rtol=5e-2, atol=5e-2)
    print("KERNEL_OK")
</pallas_src>

<mosaic_0001>
module attributes {stable_mosaic.version = 11 : i64} {
  func.func @_fused_outer_net_kernel(%arg0: i32, %arg1: memref<8x128xf32, #tpu.memory_space<vmem>>, %arg2: memref<8x32xf32, #tpu.memory_space<vmem>>, %arg3: memref<32x128xbf16, #tpu.memory_space<vmem>>, %arg4: memref<128x128xbf16, #tpu.memory_space<vmem>>, %arg5: memref<128x32xbf16, #tpu.memory_space<vmem>>, %arg6: memref<1x128xf32, #tpu.memory_space<vmem>>, %arg7: memref<1x128xf32, #tpu.memory_space<vmem>>, %arg8: memref<1x32xf32, #tpu.memory_space<vmem>>, %arg9: memref<8x32xf32, #tpu.memory_space<vmem>>, %arg10: memref<2x32xf32, #tpu.memory_space<vmem>>, %arg11: memref<8x128xf32, #tpu.memory_space<vmem>>, %arg12: memref<8x128xf32, #tpu.memory_space<vmem>>) attributes {dimension_semantics = [#tpu.dimension_semantics<arbitrary>], iteration_bounds = array<i64: 2>, scalar_prefetch = 0 : i64, scratch_operands = 2 : i64, tpu.core_type = #tpu.core_type<tc>, window_params = [{pipeline_mode = #tpu.pipeline_mode<synchronous>, transform_indices = @transform_0, window_bounds = array<i64: 8, 128>}, {transform_indices = @transform_1, window_bounds = array<i64: 8, 32>}, {pipeline_mode = #tpu.pipeline_mode<synchronous>, transform_indices = @transform_2, window_bounds = array<i64: 32, 128>}, {pipeline_mode = #tpu.pipeline_mode<synchronous>, transform_indices = @transform_3, window_bounds = array<i64: 128, 128>}, {pipeline_mode = #tpu.pipeline_mode<synchronous>, transform_indices = @transform_4, window_bounds = array<i64: 128, 32>}, {pipeline_mode = #tpu.pipeline_mode<synchronous>, transform_indices = @transform_5, window_bounds = array<i64: 1, 128>}, {pipeline_mode = #tpu.pipeline_mode<synchronous>, transform_indices = @transform_6, window_bounds = array<i64: 1, 128>}, {pipeline_mode = #tpu.pipeline_mode<synchronous>, transform_indices = @transform_7, window_bounds = array<i64: 1, 32>}, {transform_indices = @transform_8, window_bounds = array<i64: 8, 32>}, {pipeline_mode = #tpu.pipeline_mode<synchronous>, transform_indices = @transform_9, window_bounds = array<i64: 2, 32>}]} {
    %c0_i32 = arith.constant 0 : i32
    %0 = arith.cmpi eq, %arg0, %c0_i32 : i32
    %1 = arith.extui %0 : i1 to i32
    %c0_i32_0 = arith.constant 0 : i32
    %2 = arith.cmpi ne, %1, %c0_i32_0 : i32
    scf.if %2 {
      %c0_34 = arith.constant 0 : index
      %c0_35 = arith.constant 0 : index
      %39 = vector.load %arg1[%c0_34, %c0_35] : memref<8x128xf32, #tpu.memory_space<vmem>>, vector<8x128xf32>
      %c0_36 = arith.constant 0 : index
      %c0_37 = arith.constant 0 : index
      %40 = vector.load %arg11[%c0_36, %c0_37] : memref<8x128xf32, #tpu.memory_space<vmem>>, vector<8x128xf32>
      tpu.vector_store %arg11[%c0_36, %c0_37], %39 {strides = array<i32>} : memref<8x128xf32, #tpu.memory_space<vmem>>, vector<8x128xf32>,
    } else {
    }
    %c0 = arith.constant 0 : index
    %c0_1 = arith.constant 0 : index
    %3 = vector.load %arg2[%c0, %c0_1] : memref<8x32xf32, #tpu.memory_space<vmem>>, vector<8x32xf32>
    %4 = arith.truncf %3 : vector<8x32xf32> to vector<8x32xbf16>
    %c0_2 = arith.constant 0 : index
    %c0_3 = arith.constant 0 : index
    %5 = vector.load %arg3[%c0_2, %c0_3] : memref<32x128xbf16, #tpu.memory_space<vmem>>, vector<32x128xbf16>
    %cst = arith.constant dense<0.000000e+00> : vector<8x128xf32>
    %6 = tpu.matmul %4, %5, %cst {dimension_numbers = #tpu.dot_dimension_numbers<[1], [0], [0], [1], [0, 0, 1, 1], [], []>} : vector<8x32xbf16>, vector<32x128xbf16>, vector<8x128xf32> -> vector<8x128xf32>
    %c0_4 = arith.constant 0 : index
    %c0_5 = arith.constant 0 : index
    %7 = vector.load %arg6[%c0_4, %c0_5] : memref<1x128xf32, #tpu.memory_space<vmem>>, vector<1x128xf32>
    %8 = vector.broadcast %7 : vector<1x128xf32> to vector<8x128xf32>
    %9 = arith.addf %6, %8 : vector<8x128xf32>
    %cst_6 = arith.constant 0.000000e+00 : f32
    %10 = vector.broadcast %cst_6 : f32 to vector<8x128xf32>
    %11 = arith.maximumf %9, %10 : vector<8x128xf32>
    %c2_i32 = arith.constant 2 : i32
    %12 = tpu.dynamic_rotate %11 by %c2_i32 dim 0 : vector<8x128xf32>, i32 -> vector<8x128xf32>
    %c0_7 = arith.constant 0 : index
    %c0_8 = arith.constant 0 : index
    %13 = vector.load %arg12[%c0_7, %c0_8] : memref<8x128xf32, #tpu.memory_space<vmem>>, vector<8x128xf32>
    tpu.vector_store %arg12[%c0_7, %c0_8], %12 {strides = array<i32>} : memref<8x128xf32, #tpu.memory_space<vmem>>, vector<8x128xf32>,
    %c0_9 = arith.constant 0 : index
    %c0_10 = arith.constant 0 : index
    %14 = vector.load %arg12[%c0_9, %c0_10] : memref<8x128xf32, #tpu.memory_space<vmem>>, vector<2x128xf32>
    %c0_11 = arith.constant 0 : index
    %c0_12 = arith.constant 0 : index
    %15 = vector.load %arg11[%c0_11, %c0_12] : memref<8x128xf32, #tpu.memory_space<vmem>>, vector<2x128xf32>
    %c0_13 = arith.constant 0 : index
    %c0_14 = arith.constant 0 : index
    %16 = vector.load %arg12[%c0_13, %c0_14] : memref<8x128xf32, #tpu.memory_space<vmem>>, vector<2x128xf32>
    tpu.vector_store %arg12[%c0_13, %c0_14], %15 {strides = array<i32>} : memref<8x128xf32, #tpu.memory_space<vmem>>, vector<2x128xf32>,
    %c0_15 = arith.constant 0 : index
    %c0_16 = arith.constant 0 : index
    %17 = vector.load %arg12[%c0_15, %c0_16] : memref<8x128xf32, #tpu.memory_space<vmem>>, vector<8x128xf32>
    %c32_i32 = arith.constant 32 : i32
    %18 = tpu.dynamic_rotate %17 by %c32_i32 dim 1 : vector<8x128xf32>, i32 -> vector<8x128xf32>
    %19 = arith.addf %11, %18 : vector<8x128xf32>
    %20 = arith.truncf %19 : vector<8x128xf32> to vector<8x128xbf16>
    %c0_17 = arith.constant 0 : index
    %c0_18 = arith.constant 0 : index
    %21 = vector.load %arg4[%c0_17, %c0_18] : memref<128x128xbf16, #tpu.memory_space<vmem>>, vector<128x128xbf16>
    %cst_19 = arith.constant dense<0.000000e+00> : vector<8x128xf32>
    %22 = tpu.matmul %20, %21, %cst_19 {dimension_numbers = #tpu.dot_dimension_numbers<[1], [0], [0], [1], [0, 0, 1, 1], [], []>} : vector<8x128xbf16>, vector<128x128xbf16>, vector<8x128xf32> -> vector<8x128xf32>
    %c0_20 = arith.constant 0 : index
    %c0_21 = arith.constant 0 : index
    %23 = vector.load %arg7[%c0_20, %c0_21] : memref<1x128xf32, #tpu.memory_space<vmem>>, vector<1x128xf32>
    %24 = vector.broadcast %23 : vector<1x128xf32> to vector<8x128xf32>
    %25 = arith.addf %22, %24 : vector<8x128xf32>
    %cst_22 = arith.constant 0.000000e+00 : f32
    %26 = vector.broadcast %cst_22 : f32 to vector<8x128xf32>
    %27 = arith.maximumf %25, %26 : vector<8x128xf32>
    %28 = arith.addf %11, %27 : vector<8x128xf32>
    %29 = arith.truncf %28 : vector<8x128xf32> to vector<8x128xbf16>
    %c0_23 = arith.constant 0 : index
    %c0_24 = arith.constant 0 : index
    %30 = vector.load %arg5[%c0_23, %c0_24] : memref<128x32xbf16, #tpu.memory_space<vmem>>, vector<128x32xbf16>
    %cst_25 = arith.constant dense<0.000000e+00> : vector<8x32xf32>
    %31 = tpu.matmul %29, %30, %cst_25 {dimension_numbers = #tpu.dot_dimension_numbers<[1], [0], [0], [1], [0, 0, 1, 1], [], []>} : vector<8x128xbf16>, vector<128x32xbf16>, vector<8x32xf32> -> vector<8x32xf32>
    %c0_26 = arith.constant 0 : index
    %c0_27 = arith.constant 0 : index
    %32 = vector.load %arg8[%c0_26, %c0_27] : memref<1x32xf32, #tpu.memory_space<vmem>>, vector<1x32xf32>
    %33 = vector.broadcast %32 : vector<1x32xf32> to vector<8x32xf32>
    %34 = arith.addf %31, %33 : vector<8x32xf32>
    %c0_28 = arith.constant 0 : index
    %c0_29 = arith.constant 0 : index
    %35 = vector.load %arg9[%c0_28, %c0_29] : memref<8x32xf32, #tpu.memory_space<vmem>>, vector<8x32xf32>
    tpu.vector_store %arg9[%c0_28, %c0_29], %34 {strides = array<i32>} : memref<8x32xf32, #tpu.memory_space<vmem>>, vector<8x32xf32>,
    %c0_30 = arith.constant 0 : index
    %c0_31 = arith.constant 0 : index
    %36 = vector.load %arg11[%c0_30, %c0_31] : memref<8x128xf32, #tpu.memory_space<vmem>>, vector<2x128xf32>
    tpu.vector_store %arg11[%c0_30, %c0_31], %14 {strides = array<i32>} : memref<8x128xf32, #tpu.memory_space<vmem>>, vector<2x128xf32>,
    %37 = vector.extract_strided_slice %14 {offsets = [0, 0], sizes = [2, 32], strides = [1, 1]} : vector<2x128xf32> to vector<2x32xf32>
    %c0_32 = arith.constant 0 : index
    %c0_33 = arith.constant 0 : index
    %38 = vector.load %arg10[%c0_32, %c0_33] : memref<2x32xf32, #tpu.memory_space<vmem>>, vector<2x32xf32>
    tpu.vector_store %arg10[%c0_32, %c0_33], %37 {strides = array<i32>} : memref<2x32xf32, #tpu.memory_space<vmem>>, vector<2x32xf32>,
    return
  }
  func.func @transform_0(%arg0: i32) -> (i32, i32) {
    %c0_i32 = arith.constant 0 : i32
    %c0_i32_0 = arith.constant 0 : i32
    %c0_i32_1 = arith.constant 0 : i32
    return %c0_i32, %c0_i32_0 : i32, i32
  }
  func.func @transform_1(%arg0: i32) -> (i32, i32) {
    %c0_i32 = arith.constant 0 : i32
    %c0_i32_0 = arith.constant 0 : i32
    return %arg0, %c0_i32 : i32, i32
  }
  func.func @transform_2(%arg0: i32) -> (i32, i32) {
    %c0_i32 = arith.constant 0 : i32
    %c0_i32_0 = arith.constant 0 : i32
    %c0_i32_1 = arith.constant 0 : i32
    return %c0_i32, %c0_i32_0 : i32, i32
  }
  func.func @transform_3(%arg0: i32) -> (i32, i32) {
    %c0_i32 = arith.constant 0 : i32
    %c0_i32_0 = arith.constant 0 : i32
    %c0_i32_1 = arith.constant 0 : i32
    return %c0_i32, %c0_i32_0 : i32, i32
  }
  func.func @transform_4(%arg0: i32) -> (i32, i32) {
    %c0_i32 = arith.constant 0 : i32
    %c0_i32_0 = arith.constant 0 : i32
    %c0_i32_1 = arith.constant 0 : i32
    return %c0_i32, %c0_i32_0 : i32, i32
  }
  func.func @transform_5(%arg0: i32) -> (i32, i32) {
    %c0_i32 = arith.constant 0 : i32
    %c0_i32_0 = arith.constant 0 : i32
    %c0_i32_1 = arith.constant 0 : i32
    return %c0_i32, %c0_i32_0 : i32, i32
  }
  func.func @transform_6(%arg0: i32) -> (i32, i32) {
    %c0_i32 = arith.constant 0 : i32
    %c0_i32_0 = arith.constant 0 : i32
    %c0_i32_1 = arith.constant 0 : i32
    return %c0_i32, %c0_i32_0 : i32, i32
  }
  func.func @transform_7(%arg0: i32) -> (i32, i32) {
    %c0_i32 = arith.constant 0 : i32
    %c0_i32_0 = arith.constant 0 : i32
    %c0_i32_1 = arith.constant 0 : i32
    return %c0_i32, %c0_i32_0 : i32, i32
  }
  func.func @transform_8(%arg0: i32) -> (i32, i32) {
    %c0_i32 = arith.constant 0 : i32
    %c0_i32_0 = arith.constant 0 : i32
    return %arg0, %c0_i32 : i32, i32
  }
  func.func @transform_9(%arg0: i32) -> (i32, i32) {
    %c0_i32 = arith.constant 0 : i32
    %c0_i32_0 = arith.constant 0 : i32
    %c0_i32_1 = arith.constant 0 : i32
    return %c0_i32, %c0_i32_0 : i32, i32
  }
}

</mosaic_0001>

<llo_original>
// kernel: _fused_forward.1
$region0: #{_fused_forward.1}
  #allocation0 [shape = 'u32[]', space=smem, size = 0x4, offset = 0x4, fixed_abs, tag = 'smem constant byte address 0x4 - core index']
  #allocation1 [shape = 'u32[144,128]{1,0:T(1,128)}', space=vmem, size = 0x12000, scoped, tag = 'internal scratch']
  #allocation2 [shape = 'f32[8,128]{1,0:T(8,128)}', space=vmem, size = 0x1000, scoped, tag = 'scratch operand']
  #allocation3 [shape = 'f32[8,128]{1,0:T(8,128)}', space=vmem, size = 0x1000, scoped, tag = 'scratch operand']
  %s0 = inlined_call_operand.vmem [shape: f32[8,128], index: 0, kind: input, shape index: {}]
  %s1 = inlined_call_operand.vmem [shape: f32[16,32], index: 1, kind: input, shape index: {}]
  %s2 = inlined_call_operand.vmem [shape: bf16[32,128], index: 2, kind: input, shape index: {}]
  %s3 = inlined_call_operand.vmem [shape: bf16[128,128], index: 3, kind: input, shape index: {}]
  %s4 = inlined_call_operand.vmem [shape: bf16[128,32], index: 4, kind: input, shape index: {}]
  %s5 = inlined_call_operand.vmem [shape: f32[1,128], index: 5, kind: input, shape index: {}]
  %s6 = inlined_call_operand.hbm [shape: f32[1,128], index: 6, kind: input, shape index: {}]
  %s7 = inlined_call_operand.hbm [shape: f32[1,32], index: 7, kind: input, shape index: {}]
  %s8 = inlined_call_operand.hbm [shape: f32[16,32], index: 8, kind: output, shape index: {0}]
  %s9 = inlined_call_operand.hbm [shape: f32[2,32], index: 9, kind: output, shape index: {1}]
  %10 = xla_tuple %s8, %s9
  %s11 = sld [smem:[#allocation0]]
  $region85: #{_fused_forward.1} parent=0
    _
  %s13 = ssub.s32 1, %s11
  %s14 = scalar_select 0, %s13, %s11
  $region1: #{_fused_forward.1} parent=0
    #allocation4 [shape = 'u8[512]{0}', space=vmem, size = 0x400, scoped, tag = 'input window, operand 6, single buffered']
    #allocation5 [shape = 's32[2]{0}', space=sflag, size = 0x8, scoped, tag = 'scoped memory for _fused_forward.1']
    #allocation6 [shape = 's32[2]{0}', space=sflag, size = 0x8, scoped, tag = 'scoped memory for _fused_forward.1']
    #allocation7 [shape = 'u8[512]{0}', space=vmem, size = 0x400, scoped, tag = 'input window, operand 7, single buffered']
    #allocation8 [shape = 's32[1]{0}', space=sflag, size = 0x4, scoped, tag = 'scoped memory for _fused_forward.1']
    #allocation9 [shape = 'u8[8192]{0}', space=vmem, size = 0x2000, scoped, tag = 'output window, operand 0']
    #allocation10 [shape = 'u8[1024]{0}', space=vmem, size = 0x400, scoped, tag = 'output window, operand 1, single buffered']
    #allocation11 [shape = 's32[1]{0}', space=sflag, size = 0x4, scoped, tag = 'scoped memory for _fused_forward.1']
    %15 = vsyncpa [#allocation5], 0
    %16 = vsyncpa [#allocation8], 0
    %17 = vsyncpa [#allocation6], 0
    %s18 = scalar_lea.sflag [#allocation6], 1
    %19 = vsyncpa %s18, 0
    %20 = vsyncpa [#allocation11], 0
    loop: start=0, step=1, limit=4
    $region2: #{_fused_forward.1} parent=1 // loop_pre_header
      _
    $region3: #{_fused_forward.1} parent=1 // loop_header
      %s22 = sphi 0, %s26
      %p23 = scmp.ge.s32.totalorder %s22, 4
      %s30 = sphi 0, %s30
      %s32 = sphi 0, %s30
      %s33 = sphi 0, %s32
      %s47 = sphi 0, %s33
      %s53 = sphi 0, %s55
      %s56 = sphi 0, %s53
      %s57 = sphi 0, %s56
      %s73 = sphi 0, %s57
      %s77 = sphi 0, %s77
      %s79 = sphi 0, %s77
      %s80 = sphi 0, %s79
      %s94 = sphi 0, %s80
      %s98 = sphi 0, %s98
      %s100 = sphi 0, %s98
      %s101 = sphi 0, %s100
      %s115 = sphi 0, %s101
      %s119 = sphi 0, %s119
      %s121 = sphi 0, %s119
      %s122 = sphi 0, %s121
      %s136 = sphi 0, %s122
      %s140 = sphi 0, %s140
      %s142 = sphi 0, %s140
      %s143 = sphi 0, %s142
      %s157 = sphi 0, %s143
      %s161 = sphi 0, %s161
      %s163 = sphi 0, %s161
      %s164 = sphi 0, %s163
      %s178 = sphi 0, %s164
      %s182 = sphi 0, %s182
      %s184 = sphi 0, %s182
      %s185 = sphi 0, %s184
      %s199 = sphi 0, %s185
      %s205 = sphi 0, %s207
      %s208 = sphi 0, %s205
      %s209 = sphi 0, %s208
      %s225 = sphi 0, %s209
      %s229 = sphi 0, %s229
      %s231 = sphi 0, %s229
      %s232 = sphi 0, %s231
      %s246 = sphi 0, %s232
    $region4: #{_fused_forward.1} parent=1 // loop_header_branch
      %25 = sbr.rel (%p23) target = $region8
    $region5: #{_fused_forward.1} parent=1 // loop_body
      %s27 = ssub.s32 %s22, 1
      %s28 = ssub.s32 %s22, 2
      %s29 = sadd.s32 %s22, 1
      %s31 = sadd.s32 %s30, 1
      %p34 = scmp.eq.s32.totalorder %s22, 1
      %p35 = scmp.ne.s32.totalorder %s30, %s32
      %p36 = scmp.eq.s32.totalorder %s22, 0
      %p37 = por %p35, %p36
      %p38 = scmp.ne.s32.totalorder %s30, %s32
      %p39 = scmp.eq.s32.totalorder %s27, 1
      %p40 = por %p38, %p39
      %p41 = scmp.ne.s32.totalorder %s32, %s33
      %p42 = scmp.eq.s32.totalorder %s27, 0
      %p43 = por %p41, %p42
      %p44 = scmp.ne.s32.totalorder %s32, %s33
      %p45 = scmp.eq.s32.totalorder %s28, 1
      %p46 = por %p44, %p45
      %p48 = scmp.ne.s32.totalorder %s33, %s47
      %p49 = scmp.eq.s32.totalorder %s28, 0
      %p50 = por %p48, %p49
      %s51 = ssub.s32 %s22, %s29
      %p52 = scmp.eq.s32.totalorder %s51, 0
      %s54 = sadd.s32 %s53, 1
      %s55 = scalar_select %p52, %s53, %s54
      %p58 = pneg %p52
      %p59 = scmp.eq.s32.totalorder %s22, 1
      %p60 = por %p58, %p59
      %p61 = scmp.ne.s32.totalorder %s53, %s56
      %p62 = scmp.eq.s32.totalorder %s22, 0
      %p63 = por %p61, %p62
      %p64 = scmp.ne.s32.totalorder %s53, %s56
      %p65 = scmp.eq.s32.totalorder %s27, 1
      %p66 = por %p64, %p65
      %p67 = scmp.ne.s32.totalorder %s56, %s57
      %p68 = scmp.eq.s32.totalorder %s27, 0
      %p69 = por %p67, %p68
      %p70 = scmp.ne.s32.totalorder %s56, %s57
      %p71 = scmp.eq.s32.totalorder %s28, 1
      %p72 = por %p70, %p71
      %p74 = scmp.ne.s32.totalorder %s57, %s73
      %p75 = scmp.eq.s32.totalorder %s28, 0
      %p76 = por %p74, %p75
      %s78 = sadd.s32 %s77, 1
      %p81 = scmp.eq.s32.totalorder %s22, 1
      %p82 = scmp.ne.s32.totalorder %s77, %s79
      %p83 = scmp.eq.s32.totalorder %s22, 0
      %p84 = por %p82, %p83
      %p85 = scmp.ne.s32.totalorder %s77, %s79
      %p86 = scmp.eq.s32.totalorder %s27, 1
      %p87 = por %p85, %p86
      %p88 = scmp.ne.s32.totalorder %s79, %s80
      %p89 = scmp.eq.s32.totalorder %s27, 0
      %p90 = por %p88, %p89
      %p91 = scmp.ne.s32.totalorder %s79, %s80
      %p92 = scmp.eq.s32.totalorder %s28, 1
      %p93 = por %p91, %p92
      %p95 = scmp.ne.s32.totalorder %s80, %s94
      %p96 = scmp.eq.s32.totalorder %s28, 0
      %p97 = por %p95, %p96
      %s99 = sadd.s32 %s98, 1
      %p102 = scmp.eq.s32.totalorder %s22, 1
      %p103 = scmp.ne.s32.totalorder %s98, %s100
      %p104 = scmp.eq.s32.totalorder %s22, 0
      %p105 = por %p103, %p104
      %p106 = scmp.ne.s32.totalorder %s98, %s100
      %p107 = scmp.eq.s32.totalorder %s27, 1
      %p108 = por %p106, %p107
      %p109 = scmp.ne.s32.totalorder %s100, %s101
      %p110 = scmp.eq.s32.totalorder %s27, 0
      %p111 = por %p109, %p110
      %p112 = scmp.ne.s32.totalorder %s100, %s101
      %p113 = scmp.eq.s32.totalorder %s28, 1
      %p114 = por %p112, %p113
      %p116 = scmp.ne.s32.totalorder %s101, %s115
      %p117 = scmp.eq.s32.totalorder %s28, 0
      %p118 = por %p116, %p117
      %s120 = sadd.s32 %s119, 1
      %p123 = scmp.eq.s32.totalorder %s22, 1
      %p124 = scmp.ne.s32.totalorder %s119, %s121
      %p125 = scmp.eq.s32.totalorder %s22, 0
      %p126 = por %p124, %p125
      %p127 = scmp.ne.s32.totalorder %s119, %s121
      %p128 = scmp.eq.s32.totalorder %s27, 1
      %p129 = por %p127, %p128
      %p130 = scmp.ne.s32.totalorder %s121, %s122
      %p131 = scmp.eq.s32.totalorder %s27, 0
      %p132 = por %p130, %p131
      %p133 = scmp.ne.s32.totalorder %s121, %s122
      %p134 = scmp.eq.s32.totalorder %s28, 1
      %p135 = por %p133, %p134
      %p137 = scmp.ne.s32.totalorder %s122, %s136
      %p138 = scmp.eq.s32.totalorder %s28, 0
      %p139 = por %p137, %p138
      %s141 = sadd.s32 %s140, 1
      %p144 = scmp.eq.s32.totalorder %s22, 1
      %p145 = scmp.ne.s32.totalorder %s140, %s142
      %p146 = scmp.eq.s32.totalorder %s22, 0
      %p147 = por %p145, %p146
      %p148 = scmp.ne.s32.totalorder %s140, %s142
      %p149 = scmp.eq.s32.totalorder %s27, 1
      %p150 = por %p148, %p149
      %p151 = scmp.ne.s32.totalorder %s142, %s143
      %p152 = scmp.eq.s32.totalorder %s27, 0
      %p153 = por %p151, %p152
      %p154 = scmp.ne.s32.totalorder %s142, %s143
      %p155 = scmp.eq.s32.totalorder %s28, 1
      %p156 = por %p154, %p155
      %p158 = scmp.ne.s32.totalorder %s143, %s157
      %p159 = scmp.eq.s32.totalorder %s28, 0
      %p160 = por %p158, %p159
      %s162 = sadd.s32 %s161, 1
      %p165 = scmp.eq.s32.totalorder %s22, 1
      %p166 = scmp.ne.s32.totalorder %s161, %s163
      %p167 = scmp.eq.s32.totalorder %s22, 0
      %p168 = por %p166, %p167
      %p169 = scmp.ne.s32.totalorder %s161, %s163
      %p170 = scmp.eq.s32.totalorder %s27, 1
      %p171 = por %p169, %p170
      %p172 = scmp.ne.s32.totalorder %s163, %s164
      %p173 = scmp.eq.s32.totalorder %s27, 0
      %p174 = por %p172, %p173
      %p175 = scmp.ne.s32.totalorder %s163, %s164
      %p176 = scmp.eq.s32.totalorder %s28, 1
      %p177 = por %p175, %p176
      %p179 = scmp.ne.s32.totalorder %s164, %s178
      %p180 = scmp.eq.s32.totalorder %s28, 0
      %p181 = por %p179, %p180
      %s183 = sadd.s32 %s182, 1
      %p186 = scmp.eq.s32.totalorder %s22, 1
      %p187 = scmp.ne.s32.totalorder %s182, %s184
      %p188 = scmp.eq.s32.totalorder %s22, 0
      %p189 = por %p187, %p188
      %p190 = scmp.ne.s32.totalorder %s182, %s184
      %p191 = scmp.eq.s32.totalorder %s27, 1
      %p192 = por %p190, %p191
      %p193 = scmp.ne.s32.totalorder %s184, %s185
      %p194 = scmp.eq.s32.totalorder %s27, 0
      %p195 = por %p193, %p194
      %p196 = scmp.ne.s32.totalorder %s184, %s185
      %p197 = scmp.eq.s32.totalorder %s28, 1
      %p198 = por %p196, %p197
      %p200 = scmp.ne.s32.totalorder %s185, %s199
      %p201 = scmp.eq.s32.totalorder %s28, 0
      %p202 = por %p200, %p201
      %s203 = ssub.s32 %s22, %s29
      %p204 = scmp.eq.s32.totalorder %s203, 0
      %s206 = sadd.s32 %s205, 1
      %s207 = scalar_select %p204, %s205, %s206
      %p210 = pneg %p204
      %p211 = scmp.eq.s32.totalorder %s22, 1
      %p212 = por %p210, %p211
      %p213 = scmp.ne.s32.totalorder %s205, %s208
      %p214 = scmp.eq.s32.totalorder %s22, 0
      %p215 = por %p213, %p214
      %p216 = scmp.ne.s32.totalorder %s205, %s208
      %p217 = scmp.eq.s32.totalorder %s27, 1
      %p218 = por %p216, %p217
      %p219 = scmp.ne.s32.totalorder %s208, %s209
      %p220 = scmp.eq.s32.totalorder %s27, 0
      %p221 = por %p219, %p220
      %p222 = scmp.ne.s32.totalorder %s208, %s209
      %p223 = scmp.eq.s32.totalorder %s28, 1
      %p224 = por %p222, %p223
      %p226 = scmp.ne.s32.totalorder %s209, %s225
      %p227 = scmp.eq.s32.totalorder %s28, 0
      %p228 = por %p226, %p227
      %s230 = sadd.s32 %s229, 1
      %p233 = scmp.eq.s32.totalorder %s22, 1
      %p234 = scmp.ne.s32.totalorder %s229, %s231
      %p235 = scmp.eq.s32.totalorder %s22, 0
      %p236 = por %p234, %p235
      %p237 = scmp.ne.s32.totalorder %s229, %s231
      %p238 = scmp.eq.s32.totalorder %s27, 1
      %p239 = por %p237, %p238
      %p240 = scmp.ne.s32.totalorder %s231, %s232
      %p241 = scmp.eq.s32.totalorder %s27, 0
      %p242 = por %p240, %p241
      %p243 = scmp.ne.s32.totalorder %s231, %s232
      %p244 = scmp.eq.s32.totalorder %s28, 1
      %p245 = por %p243, %p244
      %p247 = scmp.ne.s32.totalorder %s232, %s246
      %p248 = scmp.eq.s32.totalorder %s28, 0
      %p249 = por %p247, %p248
      %p250 = scmp.le.s32.totalorder 1, %s22
      %p251 = scmp.lt.s32.totalorder %s22, 3
      %p252 = pnand %p250, %p251
      %p253 = pneg %p252
      // Predicated region
      $region9: #{_fused_forward.1} parent=5 // pred_check
        _
      $region10: #{_fused_forward.1} parent=5 // pred_check_branch
        %255 = sbr.rel (%p252) target = $region12
      $region11: #{_fused_forward.1} parent=5 // pred_region
        %s256 = ssub.s32 %s22, 1
        // Predicated region
        $region13: #{_fused_forward.1} parent=11 // pred_check
          %p257 = pneg %p43
        $region14: #{_fused_forward.1} parent=11 // pred_check_branch
          %259 = sbr.rel (%p257) target = $region16
        $region15: #{_fused_forward.1} parent=11 // pred_region
          _
        $region16: #{_fused_forward.1} parent=11 // pred_fallthru
          _
        // Predicated region
        $region17: #{_fused_forward.1} parent=11 // pred_check
          %p260 = pneg %p90
        $region18: #{_fused_forward.1} parent=11 // pred_check_branch
          %262 = sbr.rel (%p260) target = $region20
        $region19: #{_fused_forward.1} parent=11 // pred_region
          _
        $region20: #{_fused_forward.1} parent=11 // pred_fallthru
          _
        // Predicated region
        $region21: #{_fused_forward.1} parent=11 // pred_check
          %p263 = pneg %p111
        $region22: #{_fused_forward.1} parent=11 // pred_check_branch
          %265 = sbr.rel (%p263) target = $region24
        $region23: #{_fused_forward.1} parent=11 // pred_region
          _
        $region24: #{_fused_forward.1} parent=11 // pred_fallthru
          _
        // Predicated region
        $region25: #{_fused_forward.1} parent=11 // pred_check
          %p266 = pneg %p132
        $region26: #{_fused_forward.1} parent=11 // pred_check_branch
          %268 = sbr.rel (%p266) target = $region28
        $region27: #{_fused_forward.1} parent=11 // pred_region
          _
        $region28: #{_fused_forward.1} parent=11 // pred_fallthru
          _
        // Predicated region
        $region29: #{_fused_forward.1} parent=11 // pred_check
          %p269 = pneg %p153
        $region30: #{_fused_forward.1} parent=11 // pred_check_branch
          %271 = sbr.rel (%p269) target = $region32
        $region31: #{_fused_forward.1} parent=11 // pred_region
          _
        $region32: #{_fused_forward.1} parent=11 // pred_fallthru
          _
        // Predicated region
        $region33: #{_fused_forward.1} parent=11 // pred_check
          %p272 = pneg %p174
        $region34: #{_fused_forward.1} parent=11 // pred_check_branch
          %274 = sbr.rel (%p272) target = $region36
        $region35: #{_fused_forward.1} parent=11 // pred_region
          %s276 = ssub.s32 16, 16
          %277 = vsyncadd [#allocation5], %s276
          %s279 = sshll.u32 [#allocation4], 4
          %s280 = int_to_ptr.vmem [resolvable:$true] %s279
          %282 = dma.hbm_to_vmem [thread:$0]  %s6, 16, %s280, [#allocation5]
        $region36: #{_fused_forward.1} parent=11 // pred_fallthru
          _
        // Predicated region
        $region37: #{_fused_forward.1} parent=11 // pred_check
          %p283 = pneg %p195
        $region38: #{_fused_forward.1} parent=11 // pred_check_branch
          %285 = sbr.rel (%p283) target = $region40
        $region39: #{_fused_forward.1} parent=11 // pred_region
          %s287 = ssub.s32 16, 16
          %288 = vsyncadd [#allocation8], %s287
          %s290 = sshll.u32 [#allocation7], 4
          %s291 = int_to_ptr.vmem [resolvable:$true] %s290
          %293 = dma.hbm_to_vmem [thread:$0]  %s7, 16, %s291, [#allocation8]
        $region40: #{_fused_forward.1} parent=11 // pred_fallthru
          _
      $region12: #{_fused_forward.1} parent=5 // pred_fallthru
        _
      %p294 = scmp.lt.s32.totalorder %s22, 2
      // Predicated region
      $region41: #{_fused_forward.1} parent=5 // pred_check
        %p295 = pneg %p294
      $region42: #{_fused_forward.1} parent=5 // pred_check_branch
        %297 = sbr.rel (%p295) target = $region44
      $region43: #{_fused_forward.1} parent=5 // pred_region
        // Predicated region
        $region45: #{_fused_forward.1} parent=43 // pred_check
          %p298 = pneg %p63
        $region46: #{_fused_forward.1} parent=43 // pred_check_branch
          %300 = sbr.rel (%p298) target = $region48
        $region47: #{_fused_forward.1} parent=43 // pred_region
          %p301 = scmp.lt.s32.totalorder %s22, 1
          %s302 = scalar_select %p301, %s22, 1
          %s303 = smul.addr %s302, 8
          %s304 = scalar_lea.vmem %s1, %s303
        $region48: #{_fused_forward.1} parent=43 // pred_fallthru
          _
      $region44: #{_fused_forward.1} parent=5 // pred_fallthru
        _
      %p305 = scmp.le.s32.totalorder 1, %s22
      %p306 = scmp.lt.s32.totalorder %s22, 3
      %p307 = pnand %p305, %p306
      %p308 = pneg %p307
      // Predicated region
      $region49: #{_fused_forward.1} parent=5 // pred_check
        _
      $region50: #{_fused_forward.1} parent=5 // pred_check_branch
        %310 = sbr.rel (%p307) target = $region52
      $region51: #{_fused_forward.1} parent=5 // pred_region
        %s311 = ssub.s32 %s22, 1
        // Predicated region
        $region53: #{_fused_forward.1} parent=51 // pred_check
          %p312 = pneg %p174
        $region54: #{_fused_forward.1} parent=51 // pred_check_branch
          %314 = sbr.rel (%p312) target = $region56
        $region55: #{_fused_forward.1} parent=51 // pred_region
          %315 = dma.done [#allocation5], 16
        $region56: #{_fused_forward.1} parent=51 // pred_fallthru
          _
        // Predicated region
        $region57: #{_fused_forward.1} parent=51 // pred_check
          %p316 = pneg %p195
        $region58: #{_fused_forward.1} parent=51 // pred_check_branch
          %318 = sbr.rel (%p316) target = $region60
        $region59: #{_fused_forward.1} parent=51 // pred_region
          %319 = dma.done [#allocation8], 16
        $region60: #{_fused_forward.1} parent=51 // pred_fallthru
          _
        %p320 = pneg %p43
        %p321 = pneg %p40
        %p322 = scmp.lt.s32.totalorder %s27, 1
        %s323 = scalar_select %p322, %s27, 1
        %s324 = smul.addr %s323, 8
        %s325 = scalar_lea.vmem %s1, %s324
        %p326 = pneg %p69
        %p327 = pneg %p66
        %p328 = pneg %p90
        %p329 = pneg %p87
        %p330 = pneg %p111
        %p331 = pneg %p108
        %p332 = pneg %p132
        %p333 = pneg %p129
        %p334 = pneg %p153
        %p335 = pneg %p150
        %p336 = pneg %p174
        %p337 = pneg %p171
        %p338 = pneg %p195
        %p339 = pneg %p192
        %p340 = pneg %p221
        %p341 = pneg %p218
        %s342 = sand.u32 %s208, 1
        %s343 = scalar_lea.sflag [#allocation6], %s342
        %s344 = sand.u32 %s208, 1
        %s345 = smul.addr %s344, 8
        %s346 = scalar_lea.vmem [#allocation9], %s345
        %p347 = pneg %p242
        %p348 = pneg %p239
        %p349 = scmp.lt.s32.totalorder %s27, 1
        %s350 = scalar_select %p349, %s27, 1
        %s351 = smul.addr %s350, 8
        %s352 = scalar_lea.vmem %s1, %s351
        %p354 = scmp.eq.s32.totalorder %s27, 0
        // Predicated region
        $region61: #{_fused_forward.1} parent=51 // pred_check
          %p355 = pneg %p354
        $region62: #{_fused_forward.1} parent=51 // pred_check_branch
          %357 = sbr.rel (%p355) target = $region64
        $region63: #{_fused_forward.1} parent=51 // pred_region
          %v358 = vld [vmem:[%s0] sm:$0xff]
          %359 = vst [vmem:[#allocation2] sm:$0xff] %v358
        $region64: #{_fused_forward.1} parent=51 // pred_fallthru
          _
        %v360 = vld [vmem:[%s352] sm:$0xff]
        %v361 = vpack.c.bf16 %v360, %v360
        %v362 = vld [vmem:[%s2] sm:$0xf]
        %v363 = vld [vmem:[%s2 + $0x4] sm:$0xf]
        %v364 = vld [vmem:[%s2 + $0x8] sm:$0xf]
        %v365 = vld [vmem:[%s2 + $0xc] sm:$0xf]
        %v366 = vld [vmem:[%s5] sm:$0x1]
        %v368 = vlaneseq
        %v369 = vshrl.u32 %v368, 7
        %v370 = vsub.s32 0, %v369
        %v371 = vrot.slane %v366, %v370
        %v377 = vunpack.c.l.b16 %v362
        %v378 = vunpack.c.l.b16 %v363
        %v379 = vunpack.c.l.b16 %v364
        %v380 = vunpack.c.l.b16 %v365
        %v381 = vpack.c.b16 %v378, %v377
        %v382 = vpack.c.b16 %v380, %v379
        %vm385 = vcmask 261120
        %v387 = vsel %vm385, %v361, 0
        %389 = vmatprep.subr.bf16.mxu0 0
        %390 = vmatpush1.bf16.msra.mxu0 %v381
        %391 = vmatprep.subr.bf16.mxu0 0
        %392 = vmatpush1.bf16.msra.mxu0 %v382
        %393 = vmatprep.subr.bf16.mxu0 0
        %394 = vmatpush1.bf16.msra.mxu0 0
        %395 = vmatprep.subr.bf16.mxu0 0
        %396 = vmatpush1.bf16.msra.mxu0 0
        %397 = vmatprep.subr.bf16.mxu0 0
        %398 = vmatpush1.bf16.msra.mxu0 0
        %399 = vmatprep.subr.bf16.mxu0 0
        %400 = vmatpush1.bf16.msra.mxu0 0
        %401 = vmatprep.subr.bf16.mxu0 0
        %402 = vmatpush1.bf16.msra.mxu0 0
        %403 = vmatprep.subr.bf16.mxu0 0
        %404 = vmatpush1.bf16.msra.mxu0 0
        %405 = vmatprep.subr.bf16.mxu0 0
        %406 = vmatpush1.bf16.msra.mxu0 0
        %407 = vmatprep.subr.bf16.mxu0 0
        %408 = vmatpush1.bf16.msra.mxu0 0
        %409 = vmatprep.subr.bf16.mxu0 0
        %410 = vmatpush1.bf16.msra.mxu0 0
        %411 = vmatprep.subr.bf16.mxu0 0
        %412 = vmatpush1.bf16.msra.mxu0 0
        %413 = vmatprep.subr.bf16.mxu0 0
        %414 = vmatpush1.bf16.msra.mxu0 0
        %415 = vmatprep.subr.bf16.mxu0 0
        %416 = vmatpush1.bf16.msra.mxu0 0
        %417 = vmatprep.subr.bf16.mxu0 0
        %418 = vmatpush1.bf16.msra.mxu0 0
        %419 = vmatprep.subr.bf16.mxu0 0
        %420 = vmatpush1.bf16.msra.mxu0 0
        %421 = vmatprep.mubr.bf16.mxu0 0
        %422 = vmatmul.mubr.bf16.gmra.mrb[0].mxu0 %v387
        %v423 = vpop.f32.mrb[0].mxu0
        %v424 = vadd.f32 %v371, %v423
        %v425 = vpop.f32.mrb[0].mxu0
        %v426 = vpop.f32.mrb[0].mxu0
        %v427 = vpop.f32.mrb[0].mxu0
        %428 = vdwg.mxu0
        %v429 = vmax.f32 %v424, 0.0
        %v430 = vrot.slane %v429, 6
        %431 = vst [vmem:[#allocation3] sm:$0xff] %v430
        %v432 = vld [vmem:[#allocation3] sm:$0x3]
        %v433 = vld [vmem:[#allocation2] sm:$0x3]
        %434 = vst [vmem:[#allocation3] sm:$0x3] %v433
        %v435 = vld [vmem:[#allocation3] sm:$0xff]
        %436 = vrot.lane.b32.xlu0 %v435, 32
        %v437 = vpop.permute.xlu0 %436
        %v438 = vadd.f32 %v429, %v437
        %v439 = vpack.c.bf16 %v438, %v438
        %v440 = vld [vmem:[%s3] sm:$0xf]
        %v441 = vld [vmem:[%s3 + $0x4] sm:$0xf]
        %v442 = vld [vmem:[%s3 + $0x8] sm:$0xf]
        %v443 = vld [vmem:[%s3 + $0xc] sm:$0xf]
        %v444 = vld [vmem:[%s3 + $0x10] sm:$0xf]
        %v445 = vld [vmem:[%s3 + $0x14] sm:$0xf]
        %v446 = vld [vmem:[%s3 + $0x18] sm:$0xf]
        %v447 = vld [vmem:[%s3 + $0x1c] sm:$0xf]
        %v448 = vld [vmem:[%s3 + $0x20] sm:$0xf]
        %v449 = vld [vmem:[%s3 + $0x24] sm:$0xf]
        %v450 = vld [vmem:[%s3 + $0x28] sm:$0xf]
        %v451 = vld [vmem:[%s3 + $0x2c] sm:$0xf]
        %v452 = vld [vmem:[%s3 + $0x30] sm:$0xf]
        %v453 = vld [vmem:[%s3 + $0x34] sm:$0xf]
        %v454 = vld [vmem:[%s3 + $0x38] sm:$0xf]
        %v455 = vld [vmem:[%s3 + $0x3c] sm:$0xf]
        %v456 = vld [vmem:[#allocation4] sm:$0x1]
        %v458 = vlaneseq
        %v459 = vshrl.u32 %v458, 7
        %v460 = vsub.s32 0, %v459
        %v461 = vrot.slane %v456, %v460
        %v479 = vunpack.c.l.b16 %v440
        %v480 = vunpack.c.l.b16 %v441
        %v481 = vunpack.c.l.b16 %v442
        %v482 = vunpack.c.l.b16 %v443
        %v483 = vunpack.c.l.b16 %v444
        %v484 = vunpack.c.l.b16 %v445
        %v485 = vunpack.c.l.b16 %v446
        %v486 = vunpack.c.l.b16 %v447
        %v487 = vunpack.c.l.b16 %v448
        %v488 = vunpack.c.l.b16 %v449
        %v489 = vunpack.c.l.b16 %v450
        %v490 = vunpack.c.l.b16 %v451
        %v491 = vunpack.c.l.b16 %v452
        %v492 = vunpack.c.l.b16 %v453
        %v493 = vunpack.c.l.b16 %v454
        %v494 = vunpack.c.l.b16 %v455
        %v495 = vpack.c.b16 %v480, %v479
        %v496 = vpack.c.b16 %v482, %v481
        %v497 = vpack.c.b16 %v484, %v483
        %v498 = vpack.c.b16 %v486, %v485
        %v499 = vpack.c.b16 %v488, %v487
        %v500 = vpack.c.b16 %v490, %v489
        %v501 = vpack.c.b16 %v492, %v491
        %v502 = vpack.c.b16 %v494, %v493
        %511 = vmatprep.subr.bf16.mxu0 0
        %512 = vmatpush1.bf16.msra.mxu0 %v495
        %513 = vmatprep.subr.bf16.mxu0 0
        %514 = vmatpush1.bf16.msra.mxu0 %v496
        %515 = vmatprep.subr.bf16.mxu0 0
        %516 = vmatpush1.bf16.msra.mxu0 %v497
        %517 = vmatprep.subr.bf16.mxu0 0
        %518 = vmatpush1.bf16.msra.mxu0 %v498
        %519 = vmatprep.subr.bf16.mxu0 0
        %520 = vmatpush1.bf16.msra.mxu0 %v499
        %521 = vmatprep.subr.bf16.mxu0 0
        %522 = vmatpush1.bf16.msra.mxu0 %v500
        %523 = vmatprep.subr.bf16.mxu0 0
        %524 = vmatpush1.bf16.msra.mxu0 %v501
        %525 = vmatprep.subr.bf16.mxu0 0
        %526 = vmatpush1.bf16.msra.mxu0 %v502
        %527 = vmatprep.subr.bf16.mxu0 0
        %528 = vmatpush1.bf16.msra.mxu0 0
        %529 = vmatprep.subr.bf16.mxu0 0
        %530 = vmatpush1.bf16.msra.mxu0 0
        %531 = vmatprep.subr.bf16.mxu0 0
        %532 = vmatpush1.bf16.msra.mxu0 0
        %533 = vmatprep.subr.bf16.mxu0 0
        %534 = vmatpush1.bf16.msra.mxu0 0
        %535 = vmatprep.subr.bf16.mxu0 0
        %536 = vmatpush1.bf16.msra.mxu0 0
        %537 = vmatprep.subr.bf16.mxu0 0
        %538 = vmatpush1.bf16.msra.mxu0 0
        %539 = vmatprep.subr.bf16.mxu0 0
        %540 = vmatpush1.bf16.msra.mxu0 0
        %541 = vmatprep.subr.bf16.mxu0 0
        %542 = vmatpush1.bf16.msra.mxu0 0
        %543 = vmatprep.mubr.bf16.mxu0 0
        %544 = vmatmul.mubr.bf16.gmra.mrb[0].mxu0 %v439
        %v545 = vpop.f32.mrb[0].mxu0
        %v546 = vadd.f32 %v461, %v545
        %v547 = vpop.f32.mrb[0].mxu0
        %v548 = vpop.f32.mrb[0].mxu0
        %v549 = vpop.f32.mrb[0].mxu0
        %550 = vdwg.mxu0
        %v551 = vmax.f32 %v546, 0.0
        %v552 = vadd.f32 %v429, %v551
        %v553 = vpack.c.bf16 %v552, %v552
        %v554 = vld [vmem:[%s4] sm:$0xf]
        %v555 = vld [vmem:[%s4 + $0x4] sm:$0xf]
        %v556 = vld [vmem:[%s4 + $0x8] sm:$0xf]
        %v557 = vld [vmem:[%s4 + $0xc] sm:$0xf]
        %v558 = vld [vmem:[%s4 + $0x10] sm:$0xf]
        %v559 = vld [vmem:[%s4 + $0x14] sm:$0xf]
        %v560 = vld [vmem:[%s4 + $0x18] sm:$0xf]
        %v561 = vld [vmem:[%s4 + $0x1c] sm:$0xf]
        %v562 = vld [vmem:[%s4 + $0x20] sm:$0xf]
        %v563 = vld [vmem:[%s4 + $0x24] sm:$0xf]
        %v564 = vld [vmem:[%s4 + $0x28] sm:$0xf]
        %v565 = vld [vmem:[%s4 + $0x2c] sm:$0xf]
        %v566 = vld [vmem:[%s4 + $0x30] sm:$0xf]
        %v567 = vld [vmem:[%s4 + $0x34] sm:$0xf]
        %v568 = vld [vmem:[%s4 + $0x38] sm:$0xf]
        %v569 = vld [vmem:[%s4 + $0x3c] sm:$0xf]
        %v570 = vld [vmem:[#allocation7] sm:$0x1]
        %v572 = vlaneseq
        %v573 = vshrl.u32 %v572, 7
        %v574 = vsub.s32 0, %v573
        %v575 = vrot.slane %v570, %v574
        %v593 = vunpack.c.l.b16 %v554
        %v594 = vunpack.c.l.b16 %v555
        %v595 = vunpack.c.l.b16 %v556
        %v596 = vunpack.c.l.b16 %v557
        %v597 = vunpack.c.l.b16 %v558
        %v598 = vunpack.c.l.b16 %v559
        %v599 = vunpack.c.l.b16 %v560
        %v600 = vunpack.c.l.b16 %v561
        %v601 = vunpack.c.l.b16 %v562
        %v602 = vunpack.c.l.b16 %v563
        %v603 = vunpack.c.l.b16 %v564
        %v604 = vunpack.c.l.b16 %v565
        %v605 = vunpack.c.l.b16 %v566
        %v606 = vunpack.c.l.b16 %v567
        %v607 = vunpack.c.l.b16 %v568
        %v608 = vunpack.c.l.b16 %v569
        %v609 = vpack.c.b16 %v594, %v593
        %v610 = vpack.c.b16 %v596, %v595
        %v611 = vpack.c.b16 %v598, %v597
        %v612 = vpack.c.b16 %v600, %v599
        %v613 = vpack.c.b16 %v602, %v601
        %v614 = vpack.c.b16 %v604, %v603
        %v615 = vpack.c.b16 %v606, %v605
        %v616 = vpack.c.b16 %v608, %v607
        %625 = vmatprep.subr.bf16.mxu0 0
        %626 = vmatpush1.bf16.msra.mxu0 %v609
        %627 = vmatprep.subr.bf16.mxu0 0
        %628 = vmatpush1.bf16.msra.mxu0 %v610
        %629 = vmatprep.subr.bf16.mxu0 0
        %630 = vmatpush1.bf16.msra.mxu0 %v611
        %631 = vmatprep.subr.bf16.mxu0 0
        %632 = vmatpush1.bf16.msra.mxu0 %v612
        %633 = vmatprep.subr.bf16.mxu0 0
        %634 = vmatpush1.bf16.msra.mxu0 %v613
        %635 = vmatprep.subr.bf16.mxu0 0
        %636 = vmatpush1.bf16.msra.mxu0 %v614
        %637 = vmatprep.subr.bf16.mxu0 0
        %638 = vmatpush1.bf16.msra.mxu0 %v615
        %639 = vmatprep.subr.bf16.mxu0 0
        %640 = vmatpush1.bf16.msra.mxu0 %v616
        %641 = vmatprep.subr.bf16.mxu0 0
        %642 = vmatpush1.bf16.msra.mxu0 0
        %643 = vmatprep.subr.bf16.mxu0 0
        %644 = vmatpush1.bf16.msra.mxu0 0
        %645 = vmatprep.subr.bf16.mxu0 0
        %646 = vmatpush1.bf16.msra.mxu0 0
        %647 = vmatprep.subr.bf16.mxu0 0
        %648 = vmatpush1.bf16.msra.mxu0 0
        %649 = vmatprep.subr.bf16.mxu0 0
        %650 = vmatpush1.bf16.msra.mxu0 0
        %651 = vmatprep.subr.bf16.mxu0 0
        %652 = vmatpush1.bf16.msra.mxu0 0
        %653 = vmatprep.subr.bf16.mxu0 0
        %654 = vmatpush1.bf16.msra.mxu0 0
        %655 = vmatprep.subr.bf16.mxu0 0
        %656 = vmatpush1.bf16.msra.mxu0 0
        %657 = vmatprep.mubr.bf16.mxu0 0
        %658 = vmatmul.mubr.bf16.gmra.mrb[0].mxu0 %v553
        %v659 = vpop.f32.mrb[0].mxu0
        %v660 = vadd.f32 %v575, %v659
        %v661 = vpop.f32.mrb[0].mxu0
        %v662 = vpop.f32.mrb[0].mxu0
        %v663 = vpop.f32.mrb[0].mxu0
        %664 = vdwg.mxu0
        %665 = vst.msk [vmem:[%s346] sm:$0xff] %vm385, %v660
        %666 = vst [vmem:[#allocation2] sm:$0x3] %v432
        %vm667 = vcmask 254976
        %668 = vst.msk [vmem:[#allocation10] sm:$0x3] %vm667, %v432
        %s669 = sand.u32 %s208, 1
        %s670 = scalar_lea.sflag [#allocation6], %s669
        %s671 = sand.u32 %s208, 1
        %s672 = smul.addr %s671, 8
        %s673 = scalar_lea.vmem [#allocation9], %s672
        // Predicated region
        $region65: #{_fused_forward.1} parent=51 // pred_check
          %p674 = pneg %p218
        $region66: #{_fused_forward.1} parent=51 // pred_check_branch
          %676 = sbr.rel (%p674) target = $region68
        $region67: #{_fused_forward.1} parent=51 // pred_region
          %s678 = ssub.s32 128, 128
          %679 = vsyncadd %s670, %s678
          %s680 = smul.addr %s27, 128
          %s681 = scalar_lea.hbm %s8, %s680
          %s683 = sshll.u32 %s673, 4
          %s684 = int_to_ptr.vmem [resolvable:$true] %s683
          %686 = dma.vmem_to_hbm [thread:$0]  %s684, 128, %s681, %s670
        $region68: #{_fused_forward.1} parent=51 // pred_fallthru
          _
        // Predicated region
        $region69: #{_fused_forward.1} parent=51 // pred_check
          %p687 = pneg %p239
        $region70: #{_fused_forward.1} parent=51 // pred_check_branch
          %689 = sbr.rel (%p687) target = $region72
        $region71: #{_fused_forward.1} parent=51 // pred_region
          %s691 = ssub.s32 32, 32
          %692 = vsyncadd [#allocation11], %s691
          %s694 = sshll.u32 [#allocation10], 4
          %s695 = int_to_ptr.vmem [resolvable:$true] %s694
          %697 = dma.vmem_to_hbm [thread:$0]  %s695, 32, %s9, [#allocation11]
        $region72: #{_fused_forward.1} parent=51 // pred_fallthru
          _
        // Predicated region
        $region73: #{_fused_forward.1} parent=51 // pred_check
          %p698 = pneg %p239
        $region74: #{_fused_forward.1} parent=51 // pred_check_branch
          %700 = sbr.rel (%p698) target = $region76
        $region75: #{_fused_forward.1} parent=51 // pred_region
          %701 = dma.done [#allocation11], 32
        $region76: #{_fused_forward.1} parent=51 // pred_fallthru
          _
      $region52: #{_fused_forward.1} parent=5 // pred_fallthru
        _
      %p702 = scmp.le.s32.totalorder 2, %s22
      // Predicated region
      $region77: #{_fused_forward.1} parent=5 // pred_check
        %p703 = pneg %p702
      $region78: #{_fused_forward.1} parent=5 // pred_check_branch
        %705 = sbr.rel (%p703) target = $region80
      $region79: #{_fused_forward.1} parent=5 // pred_region
        %s706 = ssub.s32 %s22, 2
        // Predicated region
        $region81: #{_fused_forward.1} parent=79 // pred_check
          %p707 = pneg %p224
        $region82: #{_fused_forward.1} parent=79 // pred_check_branch
          %709 = sbr.rel (%p707) target = $region84
        $region83: #{_fused_forward.1} parent=79 // pred_region
          %s710 = sand.u32 %s209, 1
          %s711 = scalar_lea.sflag [#allocation6], %s710
          %s712 = sand.u32 %s209, 1
          %s713 = smul.addr %s712, 8
          %s714 = scalar_lea.vmem [#allocation9], %s713
          %715 = dma.done %s711, 128
        $region84: #{_fused_forward.1} parent=79 // pred_fallthru
          _
      $region80: #{_fused_forward.1} parent=5 // pred_fallthru
        _
    $region6: #{_fused_forward.1} parent=1 // loop_footer
      %s26 = sadd.s32 1, %s22
    $region7: #{_fused_forward.1} parent=1 // loop_footer_branch
      %21 = sbr.rel target = $region3
    $region8: #{_fused_forward.1} parent=1 // loop_exit
      _
    %716 = vsyncpa [#allocation5], 1
    %s717 = scalar_lea.sflag [#allocation5], 1
    %718 = vsyncpa %s717, 1
    %719 = vsyncpa [#allocation8], 1
    %720 = vsyncpa [#allocation6], 1
    %s721 = scalar_lea.sflag [#allocation6], 1
    %722 = vsyncpa %s721, 1
    %723 = vsyncpa [#allocation11], 1

</llo_original>
